<compile_context>
chip_gen: v5e
topology: v5e:2x2
jax: 0.10.0
libtpu: 0.0.40
codegen_flags: <defaults>
</compile_context>

<pallas_src>
import math

import numpy as np
import jax
import jax.numpy as jnp
from jax.experimental import pallas as pl
from jax.experimental.pallas import tpu as pltpu

# Constants fixed in BaseDynamics.__init__ (deterministic, no checkpoint load).
DT = 0.05
G = 9.81
PI = float(np.pi)

_LANES = 128
# ~1 MiB per array per block: f32 elementwise saturates HBM BW (~85% of
# roofline) around 1 MiB tiles; 3 BlockSpecs x 2 pipeline buffers = 6 MiB.
_TARGET_BLOCK_BYTES = 1 << 20
# Portable scoped-VMEM cap: >= what we need, <= every generation's physical
# VMEM (v5e/v6e 128 MiB, v7x 64 MiB).
_VMEM_LIMIT_BYTES = 32 << 20
# Below this many elements a pallas_call is pure dispatch/DMA overhead.
_MIN_PALLAS_ELEMS = 1024


def _sublane_multiple(dtype) -> int:
    # (8,128) tile for 4-byte dtypes, (16,128) for bf16/f16, (32,128) for 1B.
    itemsize = jnp.dtype(dtype).itemsize
    return max(8, 32 // max(itemsize, 1))


def _round_up(x: int, m: int) -> int:
    return ((x + m - 1) // m) * m


# ---------------------------------------------------------------------------
# Kernels (elementwise bodies; each runs on one [block_rows, 128] VMEM tile)
# ---------------------------------------------------------------------------
def _propagate_kernel(var_ref, vdot_ref, out_ref):
    # new_var = var + var_dot * dt  (VPU elementwise)
    v = var_ref[...]
    dt = jnp.asarray(DT, v.dtype)                      # no dtype promotion
    out_ref[...] = (v + vdot_ref[...] * dt).astype(out_ref.dtype)


def _exp_kernel(p_ref, out_ref):
    # exp(params)  (EUP transcendental)
    out_ref[...] = jnp.exp(p_ref[...]).astype(out_ref.dtype)


# ---------------------------------------------------------------------------
# Generic lane-dense elementwise launcher
# ---------------------------------------------------------------------------
def _pallas_elementwise(kernel_fn, *arrays: jax.Array) -> jax.Array:
    """Apply `kernel_fn(*in_refs, out_ref)` elementwise over same-shape arrays.

    Arrays are flattened and repacked into a lane-dense [rows, 128] slab,
    then tiled over rows with large, VMEM-budgeted blocks.
    """
    shape = arrays[0].shape
    dtype = arrays[0].dtype
    n = int(np.prod(shape)) if shape else 1

    flat = [a.reshape(-1) for a in arrays]
    pad = (-n) % _LANES
    if pad:
        flat = [jnp.pad(f, (0, pad)) for f in flat]
    rows = (n + pad) // _LANES
    slabs = [f.reshape(rows, _LANES) for f in flat]

    sub = _sublane_multiple(dtype)
    itemsize = jnp.dtype(dtype).itemsize
    target_rows = max(sub, _round_up(_TARGET_BLOCK_BYTES // (_LANES * itemsize), sub))
    if rows >= 2 * sub:
        # Keep >= 2 grid steps when possible so v7x's two TensorCores both
        # get work (parallel axis sharding); otherwise take the 1 MiB target.
        block_rows = min(target_rows, _round_up(pl.cdiv(rows, 2), sub))
    else:
        # Full-dim block: exempt from the 8-sublane divisibility rule.
        block_rows = rows

    grid = (pl.cdiv(rows, block_rows),)
    spec = pl.BlockSpec((block_rows, _LANES), lambda i: (i, 0))

    out = pl.pallas_call(
        kernel_fn,
        out_shape=jax.ShapeDtypeStruct((rows, _LANES), dtype),
        grid_spec=pltpu.PrefetchScalarGridSpec(
            num_scalar_prefetch=0,
            grid=grid,
            in_specs=[spec] * len(slabs),
            out_specs=spec,
        ),
        compiler_params=pltpu.CompilerParams(
            dimension_semantics=("parallel",),
            vmem_limit_bytes=_VMEM_LIMIT_BYTES,
        ),
    )(*slabs)

    out_flat = out.reshape(-1)
    if pad:
        out_flat = out_flat[:n]
    return out_flat.reshape(shape)


# ---------------------------------------------------------------------------
# Wrappers (forward-pass semantics of BaseDynamics.propagate / log_transform)
# ---------------------------------------------------------------------------
def propagate(var: jax.Array, var_dot: jax.Array) -> jax.Array:
    """Euler-integrate var with var_dot over one dt step."""
    assert var.shape == var_dot.shape and var.dtype == var_dot.dtype
    n = int(np.prod(var.shape)) if var.shape else 1
    if n < _MIN_PALLAS_ELEMS:
        # Latency-dominated regime: XLA's fused elementwise op is optimal.
        return var + var_dot * jnp.asarray(DT, var.dtype)
    return _pallas_elementwise(_propagate_kernel, var, var_dot)


def log_transform(params: jax.Array) -> jax.Array:
    """exp(params); Pallas only when large enough to amortize a launch."""
    n = int(np.prod(params.shape)) if params.shape else 1
    if n < _MIN_PALLAS_ELEMS:
        # Sys-id parameter vectors are typically a handful of scalars; a
        # (8,128)-padded DMA + kernel dispatch is pure overhead there.
        return jnp.exp(params)
    return _pallas_elementwise(_exp_kernel, params)


class BaseDynamicsPallas:
    """JAX/Pallas mirror of the non-abstract parts of BaseDynamics."""

    def __init__(self, log_normal_params: bool):
        self.log_normal_params = log_normal_params
        self.dt = jnp.float32(DT)
        self.g = jnp.float32(G)
        self.pi = jnp.float32(PI)
        self.y_cart = 0.0
        self.y_vel = 0.0
        self.gear = 40.0
        self.vlim = 20

    # TODO(synk): forward() is abstract in the PyTorch module (raises
    # NotImplementedError); no concrete dynamics to translate. Once a child
    # supplies forward(), the Euler rollout loop should be fused into a
    # single kernel (timestep grid axis + VMEM-resident state) instead of one
    # propagate() call per step.
    def forward(self, state, action):
        raise NotImplementedError

    @staticmethod
    def log_transform(params):
        return log_transform(params)

    def propagate(self, var, var_dot):
        return propagate(var, var_dot)


# ---------------------------------------------------------------------------
# Demo / self-test
# ---------------------------------------------------------------------------
if __name__ == "__main__":
    key = jax.random.PRNGKey(0)
    ks = jax.random.split(key, 8)
    dyn = BaseDynamicsPallas(log_normal_params=True)

    # 1) Lane-aligned batch of states: multi-block pipelined grid (2 steps).
    var_a = jax.random.normal(ks[0], (512, 128), dtype=jnp.float32)
    dot_a = jax.random.normal(ks[1], (512, 128), dtype=jnp.float32)
    out_a = jax.block_until_ready(dyn.propagate(var_a, dot_a))
    assert jnp.allclose(out_a, var_a + dot_a * DT, rtol=1e-5, atol=1e-6), "case 1"

    # 2) Typical kinodynamic state dim (D=12): lane-dense repack path.
    var_b = jax.random.normal(ks[2], (96, 12), dtype=jnp.float32)
    dot_b = jax.random.normal(ks[3], (96, 12), dtype=jnp.float32)
    out_b = jax.block_until_ready(dyn.propagate(var_b, dot_b))
    assert jnp.allclose(out_b, var_b + dot_b * DT, rtol=1e-5, atol=1e-6), "case 2"

    # 3) Ragged shape requiring padding to a multiple of 128 lanes.
    var_c = jax.random.normal(ks[4], (33, 37), dtype=jnp.float32)
    dot_c = jax.random.normal(ks[5], (33, 37), dtype=jnp.float32)
    out_c = jax.block_until_ready(dyn.propagate(var_c, dot_c))
    assert jnp.allclose(out_c, var_c + dot_c * DT, rtol=1e-5, atol=1e-6), "case 3"

    # 4) Tiny problem: plain-JAX fast path (no Pallas launch).
    var_d = jax.random.normal(ks[6], (2, 4), dtype=jnp.float32)
    dot_d = jax.random.normal(ks[7], (2, 4), dtype=jnp.float32)
    out_d = jax.block_until_ready(dyn.propagate(var_d, dot_d))
    assert jnp.allclose(out_d, var_d + dot_d * DT, rtol=1e-5, atol=1e-6), "case 4"

    # log_transform: tiny sys-id vector (plain JAX) + large vector (Pallas).
    p_small = jax.random.normal(jax.random.PRNGKey(1), (4,), dtype=jnp.float32)
    p_large = jax.random.normal(jax.random.PRNGKey(2), (4096,), dtype=jnp.float32)
    e_small = jax.block_until_ready(BaseDynamicsPallas.log_transform(p_small))
    e_large = jax.block_until_ready(BaseDynamicsPallas.log_transform(p_large))
    assert jnp.allclose(e_small, jnp.exp(p_small), rtol=1e-5, atol=1e-5), "exp small"
    assert jnp.allclose(e_large, jnp.exp(p_large), rtol=1e-5, atol=1e-5), "exp large"

    print("KERNEL_OK")
</pallas_src>

<mosaic_0001>
module attributes {stable_mosaic.version = 11 : i64} {
  func.func @_propagate_kernel(%arg0: i32, %arg1: memref<256x128xf32, #tpu.memory_space<vmem>>, %arg2: memref<256x128xf32, #tpu.memory_space<vmem>>, %arg3: memref<256x128xf32, #tpu.memory_space<vmem>>) attributes {dimension_semantics = [#tpu.dimension_semantics<parallel>], iteration_bounds = array<i64: 2>, scalar_prefetch = 0 : i64, scratch_operands = 0 : i64, tpu.core_type = #tpu.core_type<tc>, window_params = [{transform_indices = @transform_0, window_bounds = array<i64: 256, 128>}, {transform_indices = @transform_1, window_bounds = array<i64: 256, 128>}, {transform_indices = @transform_2, window_bounds = array<i64: 256, 128>}]} {
    %c0 = arith.constant 0 : index
    %c0_0 = arith.constant 0 : index
    %0 = vector.load %arg1[%c0, %c0_0] : memref<256x128xf32, #tpu.memory_space<vmem>>, vector<256x128xf32>
    %c0_1 = arith.constant 0 : index
    %c0_2 = arith.constant 0 : index
    %1 = vector.load %arg2[%c0_1, %c0_2] : memref<256x128xf32, #tpu.memory_space<vmem>>, vector<256x128xf32>
    %cst = arith.constant 5.000000e-02 : f32
    %2 = vector.broadcast %cst : f32 to vector<256x128xf32>
    %3 = arith.mulf %1, %2 : vector<256x128xf32>
    %4 = arith.addf %0, %3 : vector<256x128xf32>
    %c0_3 = arith.constant 0 : index
    %c0_4 = arith.constant 0 : index
    %5 = vector.load %arg3[%c0_3, %c0_4] : memref<256x128xf32, #tpu.memory_space<vmem>>, vector<256x128xf32>
    tpu.vector_store %arg3[%c0_3, %c0_4], %4 {strides = array<i32>} : memref<256x128xf32, #tpu.memory_space<vmem>>, vector<256x128xf32>,
    return
  }
  func.func @transform_0(%arg0: i32) -> (i32, i32) {
    %c0_i32 = arith.constant 0 : i32
    %c0_i32_0 = arith.constant 0 : i32
    return %arg0, %c0_i32 : i32, i32
  }
  func.func @transform_1(%arg0: i32) -> (i32, i32) {
    %c0_i32 = arith.constant 0 : i32
    %c0_i32_0 = arith.constant 0 : i32
    return %arg0, %c0_i32 : i32, i32
  }
  func.func @transform_2(%arg0: i32) -> (i32, i32) {
    %c0_i32 = arith.constant 0 : i32
    %c0_i32_0 = arith.constant 0 : i32
    return %arg0, %c0_i32 : i32, i32
  }
}

</mosaic_0001>

<llo_original>
// kernel: tpu_custom_call.1
$region0: #{tpu_custom_call.1}
  #allocation0 [shape = 'u32[]', space=smem, size = 0x4, offset = 0x4, fixed_abs, tag = 'smem constant byte address 0x4 - core index']
  #allocation1 [shape = 'u32[72,128]{1,0:T(1,128)}', space=vmem, size = 0x9000, scoped, tag = 'internal scratch']
  %s0 = inlined_call_operand.hbm [shape: f32[512,128], index: 0, kind: input, shape index: {}]
  %s1 = inlined_call_operand.hbm [shape: f32[512,128], index: 1, kind: input, shape index: {}]
  %s2 = inlined_call_operand.hbm [shape: f32[512,128], index: 2, kind: output, shape index: {}]
  %s3 = sld [smem:[#allocation0]]
  $region49: #{tpu_custom_call.1} parent=0
    _
  %s5 = ssub.s32 1, %s3
  %s6 = scalar_select 0, %s5, %s3
  $region1: #{tpu_custom_call.1} parent=0
    #allocation2 [shape = 'u8[262144]{0}', space=vmem, size = 0x40000, scoped, tag = 'input window, operand 0']
    #allocation3 [shape = 's32[2]{0}', space=sflag, size = 0x8, scoped, tag = 'scoped memory for tpu_custom_call.1']
    #allocation4 [shape = 's32[2]{0}', space=sflag, size = 0x8, scoped, tag = 'scoped memory for tpu_custom_call.1']
    #allocation5 [shape = 'u8[262144]{0}', space=vmem, size = 0x40000, scoped, tag = 'input window, operand 1']
    #allocation6 [shape = 's32[2]{0}', space=sflag, size = 0x8, scoped, tag = 'scoped memory for tpu_custom_call.1']
    #allocation7 [shape = 'u8[262144]{0}', space=vmem, size = 0x40000, scoped, tag = 'output window, operand 0']
    %7 = vsyncpa [#allocation3], 0
    %s8 = scalar_lea.sflag [#allocation3], 1
    %9 = vsyncpa %s8, 0
    %10 = vsyncpa [#allocation6], 0
    %s11 = scalar_lea.sflag [#allocation6], 1
    %12 = vsyncpa %s11, 0
    %13 = vsyncpa [#allocation4], 0
    %s14 = scalar_lea.sflag [#allocation4], 1
    %15 = vsyncpa %s14, 0
    loop: start=0, step=1, limit=4
    $region2: #{tpu_custom_call.1} parent=1 // loop_pre_header
      _
    $region3: #{tpu_custom_call.1} parent=1 // loop_header
      %s17 = sphi 0, %s21
      %p18 = scmp.ge.s32.totalorder %s17, 4
      %s27 = sphi 0, %s29
      %s30 = sphi 0, %s27
      %s31 = sphi 0, %s30
      %s47 = sphi 0, %s31
      %s53 = sphi 0, %s55
      %s56 = sphi 0, %s53
      %s57 = sphi 0, %s56
      %s73 = sphi 0, %s57
      %s79 = sphi 0, %s81
      %s82 = sphi 0, %s79
      %s83 = sphi 0, %s82
      %s99 = sphi 0, %s83
    $region4: #{tpu_custom_call.1} parent=1 // loop_header_branch
      %20 = sbr.rel (%p18) target = $region8
    $region5: #{tpu_custom_call.1} parent=1 // loop_body
      %s22 = ssub.s32 %s17, 1
      %s23 = ssub.s32 %s17, 2
      %s24 = sadd.s32 %s17, 1
      %s25 = ssub.s32 %s17, %s24
      %p26 = scmp.eq.s32.totalorder %s25, 0
      %s28 = sadd.s32 %s27, 1
      %s29 = scalar_select %p26, %s27, %s28
      %p32 = pneg %p26
      %p33 = scmp.eq.s32.totalorder %s17, 1
      %p34 = por %p32, %p33
      %p35 = scmp.ne.s32.totalorder %s27, %s30
      %p36 = scmp.eq.s32.totalorder %s17, 0
      %p37 = por %p35, %p36
      %p38 = scmp.ne.s32.totalorder %s27, %s30
      %p39 = scmp.eq.s32.totalorder %s22, 1
      %p40 = por %p38, %p39
      %p41 = scmp.ne.s32.totalorder %s30, %s31
      %p42 = scmp.eq.s32.totalorder %s22, 0
      %p43 = por %p41, %p42
      %p44 = scmp.ne.s32.totalorder %s30, %s31
      %p45 = scmp.eq.s32.totalorder %s23, 1
      %p46 = por %p44, %p45
      %p48 = scmp.ne.s32.totalorder %s31, %s47
      %p49 = scmp.eq.s32.totalorder %s23, 0
      %p50 = por %p48, %p49
      %s51 = ssub.s32 %s17, %s24
      %p52 = scmp.eq.s32.totalorder %s51, 0
      %s54 = sadd.s32 %s53, 1
      %s55 = scalar_select %p52, %s53, %s54
      %p58 = pneg %p52
      %p59 = scmp.eq.s32.totalorder %s17, 1
      %p60 = por %p58, %p59
      %p61 = scmp.ne.s32.totalorder %s53, %s56
      %p62 = scmp.eq.s32.totalorder %s17, 0
      %p63 = por %p61, %p62
      %p64 = scmp.ne.s32.totalorder %s53, %s56
      %p65 = scmp.eq.s32.totalorder %s22, 1
      %p66 = por %p64, %p65
      %p67 = scmp.ne.s32.totalorder %s56, %s57
      %p68 = scmp.eq.s32.totalorder %s22, 0
      %p69 = por %p67, %p68
      %p70 = scmp.ne.s32.totalorder %s56, %s57
      %p71 = scmp.eq.s32.totalorder %s23, 1
      %p72 = por %p70, %p71
      %p74 = scmp.ne.s32.totalorder %s57, %s73
      %p75 = scmp.eq.s32.totalorder %s23, 0
      %p76 = por %p74, %p75
      %s77 = ssub.s32 %s17, %s24
      %p78 = scmp.eq.s32.totalorder %s77, 0
      %s80 = sadd.s32 %s79, 1
      %s81 = scalar_select %p78, %s79, %s80
      %p84 = pneg %p78
      %p85 = scmp.eq.s32.totalorder %s17, 1
      %p86 = por %p84, %p85
      %p87 = scmp.ne.s32.totalorder %s79, %s82
      %p88 = scmp.eq.s32.totalorder %s17, 0
      %p89 = por %p87, %p88
      %p90 = scmp.ne.s32.totalorder %s79, %s82
      %p91 = scmp.eq.s32.totalorder %s22, 1
      %p92 = por %p90, %p91
      %p93 = scmp.ne.s32.totalorder %s82, %s83
      %p94 = scmp.eq.s32.totalorder %s22, 0
      %p95 = por %p93, %p94
      %p96 = scmp.ne.s32.totalorder %s82, %s83
      %p97 = scmp.eq.s32.totalorder %s23, 1
      %p98 = por %p96, %p97
      %p100 = scmp.ne.s32.totalorder %s83, %s99
      %p101 = scmp.eq.s32.totalorder %s23, 0
      %p102 = por %p100, %p101
      %p103 = scmp.le.s32.totalorder 1, %s17
      %p104 = scmp.lt.s32.totalorder %s17, 3
      %p105 = pnand %p103, %p104
      %p106 = pneg %p105
      // Predicated region
      $region9: #{tpu_custom_call.1} parent=5 // pred_check
        _
      $region10: #{tpu_custom_call.1} parent=5 // pred_check_branch
        %108 = sbr.rel (%p105) target = $region12
      $region11: #{tpu_custom_call.1} parent=5 // pred_region
        %s109 = ssub.s32 %s17, 1
      $region12: #{tpu_custom_call.1} parent=5 // pred_fallthru
        _
      %p110 = scmp.lt.s32.totalorder %s17, 2
      // Predicated region
      $region13: #{tpu_custom_call.1} parent=5 // pred_check
        %p111 = pneg %p110
      $region14: #{tpu_custom_call.1} parent=5 // pred_check_branch
        %113 = sbr.rel (%p111) target = $region16
      $region15: #{tpu_custom_call.1} parent=5 // pred_region
        // Predicated region
        $region17: #{tpu_custom_call.1} parent=15 // pred_check
          %p114 = pneg %p37
        $region18: #{tpu_custom_call.1} parent=15 // pred_check_branch
          %116 = sbr.rel (%p114) target = $region20
        $region19: #{tpu_custom_call.1} parent=15 // pred_region
          %s117 = sand.u32 %s27, 1
          %s118 = scalar_lea.sflag [#allocation3], %s117
          %s119 = sand.u32 %s27, 1
          %s120 = smul.addr %s119, 256
          %s121 = scalar_lea.vmem [#allocation2], %s120
          %s122 = smul.u32 32, %s17
          %124 = vsyncadd %s118, 0
          %s125 = smul.addr %s122, 8
          %s126 = scalar_lea.hbm %s0, %s125
          %s127 = sshll.u32 %s126, 4
          %s128 = int_to_ptr.hbm [resolvable:$true] %s127
          %s129 = sshll.u32 %s121, 4
          %s130 = int_to_ptr.vmem [resolvable:$true] %s129
          %135 = dma.hbm_to_vmem [thread:$0]  %s128, 4096, %s130, %s118, 128, 128, 8
        $region20: #{tpu_custom_call.1} parent=15 // pred_fallthru
          _
        // Predicated region
        $region21: #{tpu_custom_call.1} parent=15 // pred_check
          %p136 = pneg %p63
        $region22: #{tpu_custom_call.1} parent=15 // pred_check_branch
          %138 = sbr.rel (%p136) target = $region24
        $region23: #{tpu_custom_call.1} parent=15 // pred_region
          %s139 = sand.u32 %s53, 1
          %s140 = scalar_lea.sflag [#allocation6], %s139
          %s141 = sand.u32 %s53, 1
          %s142 = smul.addr %s141, 256
          %s143 = scalar_lea.vmem [#allocation5], %s142
          %s144 = smul.u32 32, %s17
          %146 = vsyncadd %s140, 0
          %s147 = smul.addr %s144, 8
          %s148 = scalar_lea.hbm %s1, %s147
          %s149 = sshll.u32 %s148, 4
          %s150 = int_to_ptr.hbm [resolvable:$true] %s149
          %s151 = sshll.u32 %s143, 4
          %s152 = int_to_ptr.vmem [resolvable:$true] %s151
          %157 = dma.hbm_to_vmem [thread:$0]  %s150, 4096, %s152, %s140, 128, 128, 8
        $region24: #{tpu_custom_call.1} parent=15 // pred_fallthru
          _
      $region16: #{tpu_custom_call.1} parent=5 // pred_fallthru
        _
      %p158 = scmp.le.s32.totalorder 1, %s17
      %p159 = scmp.lt.s32.totalorder %s17, 3
      %p160 = pnand %p158, %p159
      %p161 = pneg %p160
      // Predicated region
      $region25: #{tpu_custom_call.1} parent=5 // pred_check
        _
      $region26: #{tpu_custom_call.1} parent=5 // pred_check_branch
        %163 = sbr.rel (%p160) target = $region28
      $region27: #{tpu_custom_call.1} parent=5 // pred_region
        %s164 = ssub.s32 %s17, 1
        %s165 = sand.u32 %s30, 1
        %s166 = scalar_lea.sflag [#allocation3], %s165
        %s167 = sand.u32 %s30, 1
        %s168 = smul.addr %s167, 256
        %s169 = scalar_lea.vmem [#allocation2], %s168
        // Predicated region
        $region29: #{tpu_custom_call.1} parent=27 // pred_check
          %p170 = pneg %p43
        $region30: #{tpu_custom_call.1} parent=27 // pred_check_branch
          %172 = sbr.rel (%p170) target = $region32
        $region31: #{tpu_custom_call.1} parent=27 // pred_region
          %174 = dma.done %s166, 4096
        $region32: #{tpu_custom_call.1} parent=27 // pred_fallthru
          _
        %s175 = sand.u32 %s56, 1
        %s176 = scalar_lea.sflag [#allocation6], %s175
        %s177 = sand.u32 %s56, 1
        %s178 = smul.addr %s177, 256
        %s179 = scalar_lea.vmem [#allocation5], %s178
        // Predicated region
        $region33: #{tpu_custom_call.1} parent=27 // pred_check
          %p180 = pneg %p69
        $region34: #{tpu_custom_call.1} parent=27 // pred_check_branch
          %182 = sbr.rel (%p180) target = $region36
        $region35: #{tpu_custom_call.1} parent=27 // pred_region
          %184 = dma.done %s176, 4096
        $region36: #{tpu_custom_call.1} parent=27 // pred_fallthru
          _
        %s185 = sand.u32 %s30, 1
        %s186 = scalar_lea.sflag [#allocation3], %s185
        %s187 = sand.u32 %s30, 1
        %s188 = smul.addr %s187, 256
        %s189 = scalar_lea.vmem [#allocation2], %s188
        %p190 = pneg %p43
        %p191 = pneg %p40
        %s192 = sand.u32 %s56, 1
        %s193 = scalar_lea.sflag [#allocation6], %s192
        %s194 = sand.u32 %s56, 1
        %s195 = smul.addr %s194, 256
        %s196 = scalar_lea.vmem [#allocation5], %s195
        %p197 = pneg %p69
        %p198 = pneg %p66
        %p199 = pneg %p95
        %p200 = pneg %p92
        %s201 = sand.u32 %s82, 1
        %s202 = scalar_lea.sflag [#allocation4], %s201
        %s203 = sand.u32 %s82, 1
        %s204 = smul.addr %s203, 256
        %s205 = scalar_lea.vmem [#allocation7], %s204
        %s206 = smul.u32 32, %s22
        %s207 = smul.u32 32, %s22
        %s208 = smul.u32 32, %s22
        %v209 = vld [vmem:[%s169] sm:$0xff]
        %v210 = vld [vmem:[%s169 + $0x8] sm:$0xff]
        %v211 = vld [vmem:[%s169 + $0x10] sm:$0xff]
        %v212 = vld [vmem:[%s169 + $0x18] sm:$0xff]
        %v213 = vld [vmem:[%s169 + $0x20] sm:$0xff]
        %v214 = vld [vmem:[%s169 + $0x28] sm:$0xff]
        %v215 = vld [vmem:[%s169 + $0x30] sm:$0xff]
        %v216 = vld [vmem:[%s169 + $0x38] sm:$0xff]
        %v217 = vld [vmem:[%s169 + $0x40] sm:$0xff]
        %v218 = vld [vmem:[%s169 + $0x48] sm:$0xff]
        %v219 = vld [vmem:[%s169 + $0x50] sm:$0xff]
        %v220 = vld [vmem:[%s169 + $0x58] sm:$0xff]
        %v221 = vld [vmem:[%s169 + $0x60] sm:$0xff]
        %v222 = vld [vmem:[%s169 + $0x68] sm:$0xff]
        %v223 = vld [vmem:[%s169 + $0x70] sm:$0xff]
        %v224 = vld [vmem:[%s169 + $0x78] sm:$0xff]
        %v225 = vld [vmem:[%s169 + $0x80] sm:$0xff]
        %v226 = vld [vmem:[%s169 + $0x88] sm:$0xff]
        %v227 = vld [vmem:[%s169 + $0x90] sm:$0xff]
        %v228 = vld [vmem:[%s169 + $0x98] sm:$0xff]
        %v229 = vld [vmem:[%s169 + $0xa0] sm:$0xff]
        %v230 = vld [vmem:[%s169 + $0xa8] sm:$0xff]
        %v231 = vld [vmem:[%s169 + $0xb0] sm:$0xff]
        %v232 = vld [vmem:[%s169 + $0xb8] sm:$0xff]
        %v233 = vld [vmem:[%s169 + $0xc0] sm:$0xff]
        %v234 = vld [vmem:[%s169 + $0xc8] sm:$0xff]
        %v235 = vld [vmem:[%s169 + $0xd0] sm:$0xff]
        %v236 = vld [vmem:[%s169 + $0xd8] sm:$0xff]
        %v237 = vld [vmem:[%s169 + $0xe0] sm:$0xff]
        %v238 = vld [vmem:[%s169 + $0xe8] sm:$0xff]
        %v239 = vld [vmem:[%s169 + $0xf0] sm:$0xff]
        %v240 = vld [vmem:[%s169 + $0xf8] sm:$0xff]
        %v241 = vld [vmem:[%s179] sm:$0xff]
        %v242 = vld [vmem:[%s179 + $0x8] sm:$0xff]
        %v243 = vld [vmem:[%s179 + $0x10] sm:$0xff]
        %v244 = vld [vmem:[%s179 + $0x18] sm:$0xff]
        %v245 = vld [vmem:[%s179 + $0x20] sm:$0xff]
        %v246 = vld [vmem:[%s179 + $0x28] sm:$0xff]
        %v247 = vld [vmem:[%s179 + $0x30] sm:$0xff]
        %v248 = vld [vmem:[%s179 + $0x38] sm:$0xff]
        %v249 = vld [vmem:[%s179 + $0x40] sm:$0xff]
        %v250 = vld [vmem:[%s179 + $0x48] sm:$0xff]
        %v251 = vld [vmem:[%s179 + $0x50] sm:$0xff]
        %v252 = vld [vmem:[%s179 + $0x58] sm:$0xff]
        %v253 = vld [vmem:[%s179 + $0x60] sm:$0xff]
        %v254 = vld [vmem:[%s179 + $0x68] sm:$0xff]
        %v255 = vld [vmem:[%s179 + $0x70] sm:$0xff]
        %v256 = vld [vmem:[%s179 + $0x78] sm:$0xff]
        %v257 = vld [vmem:[%s179 + $0x80] sm:$0xff]
        %v258 = vld [vmem:[%s179 + $0x88] sm:$0xff]
        %v259 = vld [vmem:[%s179 + $0x90] sm:$0xff]
        %v260 = vld [vmem:[%s179 + $0x98] sm:$0xff]
        %v261 = vld [vmem:[%s179 + $0xa0] sm:$0xff]
        %v262 = vld [vmem:[%s179 + $0xa8] sm:$0xff]
        %v263 = vld [vmem:[%s179 + $0xb0] sm:$0xff]
        %v264 = vld [vmem:[%s179 + $0xb8] sm:$0xff]
        %v265 = vld [vmem:[%s179 + $0xc0] sm:$0xff]
        %v266 = vld [vmem:[%s179 + $0xc8] sm:$0xff]
        %v267 = vld [vmem:[%s179 + $0xd0] sm:$0xff]
        %v268 = vld [vmem:[%s179 + $0xd8] sm:$0xff]
        %v269 = vld [vmem:[%s179 + $0xe0] sm:$0xff]
        %v270 = vld [vmem:[%s179 + $0xe8] sm:$0xff]
        %v271 = vld [vmem:[%s179 + $0xf0] sm:$0xff]
        %v272 = vld [vmem:[%s179 + $0xf8] sm:$0xff]
        %v273 = vmul.f32 %v241, 0.05
        %v274 = vmul.f32 %v242, 0.05
        %v275 = vmul.f32 %v243, 0.05
        %v276 = vmul.f32 %v244, 0.05
        %v277 = vmul.f32 %v245, 0.05
        %v278 = vmul.f32 %v246, 0.05
        %v279 = vmul.f32 %v247, 0.05
        %v280 = vmul.f32 %v248, 0.05
        %v281 = vmul.f32 %v249, 0.05
        %v282 = vmul.f32 %v250, 0.05
        %v283 = vmul.f32 %v251, 0.05
        %v284 = vmul.f32 %v252, 0.05
        %v285 = vmul.f32 %v253, 0.05
        %v286 = vmul.f32 %v254, 0.05
        %v287 = vmul.f32 %v255, 0.05
        %v288 = vmul.f32 %v256, 0.05
        %v289 = vmul.f32 %v257, 0.05
        %v290 = vmul.f32 %v258, 0.05
        %v291 = vmul.f32 %v259, 0.05
        %v292 = vmul.f32 %v260, 0.05
        %v293 = vmul.f32 %v261, 0.05
        %v294 = vmul.f32 %v262, 0.05
        %v295 = vmul.f32 %v263, 0.05
        %v296 = vmul.f32 %v264, 0.05
        %v297 = vmul.f32 %v265, 0.05
        %v298 = vmul.f32 %v266, 0.05
        %v299 = vmul.f32 %v267, 0.05
        %v300 = vmul.f32 %v268, 0.05
        %v301 = vmul.f32 %v269, 0.05
        %v302 = vmul.f32 %v270, 0.05
        %v303 = vmul.f32 %v271, 0.05
        %v304 = vmul.f32 %v272, 0.05
        %v305 = vadd.f32 %v209, %v273
        %v306 = vadd.f32 %v210, %v274
        %v307 = vadd.f32 %v211, %v275
        %v308 = vadd.f32 %v212, %v276
        %v309 = vadd.f32 %v213, %v277
        %v310 = vadd.f32 %v214, %v278
        %v311 = vadd.f32 %v215, %v279
        %v312 = vadd.f32 %v216, %v280
        %v313 = vadd.f32 %v217, %v281
        %v314 = vadd.f32 %v218, %v282
        %v315 = vadd.f32 %v219, %v283
        %v316 = vadd.f32 %v220, %v284
        %v317 = vadd.f32 %v221, %v285
        %v318 = vadd.f32 %v222, %v286
        %v319 = vadd.f32 %v223, %v287
        %v320 = vadd.f32 %v224, %v288
        %v321 = vadd.f32 %v225, %v289
        %v322 = vadd.f32 %v226, %v290
        %v323 = vadd.f32 %v227, %v291
        %v324 = vadd.f32 %v228, %v292
        %v325 = vadd.f32 %v229, %v293
        %v326 = vadd.f32 %v230, %v294
        %v327 = vadd.f32 %v231, %v295
        %v328 = vadd.f32 %v232, %v296
        %v329 = vadd.f32 %v233, %v297
        %v330 = vadd.f32 %v234, %v298
        %v331 = vadd.f32 %v235, %v299
        %v332 = vadd.f32 %v236, %v300
        %v333 = vadd.f32 %v237, %v301
        %v334 = vadd.f32 %v238, %v302
        %v335 = vadd.f32 %v239, %v303
        %v336 = vadd.f32 %v240, %v304
        %337 = vst [vmem:[%s205] sm:$0xff] %v305
        %338 = vst [vmem:[%s205 + $0x8] sm:$0xff] %v306
        %339 = vst [vmem:[%s205 + $0x10] sm:$0xff] %v307
        %340 = vst [vmem:[%s205 + $0x18] sm:$0xff] %v308
        %341 = vst [vmem:[%s205 + $0x20] sm:$0xff] %v309
        %342 = vst [vmem:[%s205 + $0x28] sm:$0xff] %v310
        %343 = vst [vmem:[%s205 + $0x30] sm:$0xff] %v311
        %344 = vst [vmem:[%s205 + $0x38] sm:$0xff] %v312
        %345 = vst [vmem:[%s205 + $0x40] sm:$0xff] %v313
        %346 = vst [vmem:[%s205 + $0x48] sm:$0xff] %v314
        %347 = vst [vmem:[%s205 + $0x50] sm:$0xff] %v315
        %348 = vst [vmem:[%s205 + $0x58] sm:$0xff] %v316
        %349 = vst [vmem:[%s205 + $0x60] sm:$0xff] %v317
        %350 = vst [vmem:[%s205 + $0x68] sm:$0xff] %v318
        %351 = vst [vmem:[%s205 + $0x70] sm:$0xff] %v319
        %352 = vst [vmem:[%s205 + $0x78] sm:$0xff] %v320
        %353 = vst [vmem:[%s205 + $0x80] sm:$0xff] %v321
        %354 = vst [vmem:[%s205 + $0x88] sm:$0xff] %v322
        %355 = vst [vmem:[%s205 + $0x90] sm:$0xff] %v323
        %356 = vst [vmem:[%s205 + $0x98] sm:$0xff] %v324
        %357 = vst [vmem:[%s205 + $0xa0] sm:$0xff] %v325
        %358 = vst [vmem:[%s205 + $0xa8] sm:$0xff] %v326
        %359 = vst [vmem:[%s205 + $0xb0] sm:$0xff] %v327
        %360 = vst [vmem:[%s205 + $0xb8] sm:$0xff] %v328
        %361 = vst [vmem:[%s205 + $0xc0] sm:$0xff] %v329
        %362 = vst [vmem:[%s205 + $0xc8] sm:$0xff] %v330
        %363 = vst [vmem:[%s205 + $0xd0] sm:$0xff] %v331
        %364 = vst [vmem:[%s205 + $0xd8] sm:$0xff] %v332
        %365 = vst [vmem:[%s205 + $0xe0] sm:$0xff] %v333
        %366 = vst [vmem:[%s205 + $0xe8] sm:$0xff] %v334
        %367 = vst [vmem:[%s205 + $0xf0] sm:$0xff] %v335
        %368 = vst [vmem:[%s205 + $0xf8] sm:$0xff] %v336
        %s369 = sand.u32 %s82, 1
        %s370 = scalar_lea.sflag [#allocation4], %s369
        %s371 = sand.u32 %s82, 1
        %s372 = smul.addr %s371, 256
        %s373 = scalar_lea.vmem [#allocation7], %s372
        // Predicated region
        $region37: #{tpu_custom_call.1} parent=27 // pred_check
          %p374 = pneg %p92
        $region38: #{tpu_custom_call.1} parent=27 // pred_check_branch
          %376 = sbr.rel (%p374) target = $region40
        $region39: #{tpu_custom_call.1} parent=27 // pred_region
          %s377 = smul.u32 32, %s22
          %379 = vsyncadd %s370, 0
          %s380 = smul.addr %s377, 8
          %s381 = scalar_lea.hbm %s2, %s380
          %s382 = sshll.u32 %s373, 4
          %s383 = int_to_ptr.vmem [resolvable:$true] %s382
          %s384 = sshll.u32 %s381, 4
          %s385 = int_to_ptr.hbm [resolvable:$true] %s384
          %390 = dma.vmem_to_hbm [thread:$0]  %s383, 4096, %s385, %s370, 128, 128, 8
        $region40: #{tpu_custom_call.1} parent=27 // pred_fallthru
          _
      $region28: #{tpu_custom_call.1} parent=5 // pred_fallthru
        _
      %p391 = scmp.le.s32.totalorder 2, %s17
      // Predicated region
      $region41: #{tpu_custom_call.1} parent=5 // pred_check
        %p392 = pneg %p391
      $region42: #{tpu_custom_call.1} parent=5 // pred_check_branch
        %394 = sbr.rel (%p392) target = $region44
      $region43: #{tpu_custom_call.1} parent=5 // pred_region
        %s395 = ssub.s32 %s17, 2
        // Predicated region
        $region45: #{tpu_custom_call.1} parent=43 // pred_check
          %p396 = pneg %p98
        $region46: #{tpu_custom_call.1} parent=43 // pred_check_branch
          %398 = sbr.rel (%p396) target = $region48
        $region47: #{tpu_custom_call.1} parent=43 // pred_region
          %s399 = sand.u32 %s83, 1
          %s400 = scalar_lea.sflag [#allocation4], %s399
          %s401 = sand.u32 %s83, 1
          %s402 = smul.addr %s401, 256
          %s403 = scalar_lea.vmem [#allocation7], %s402
          %405 = dma.done %s400, 4096
        $region48: #{tpu_custom_call.1} parent=43 // pred_fallthru
          _
      $region44: #{tpu_custom_call.1} parent=5 // pred_fallthru
        _
    $region6: #{tpu_custom_call.1} parent=1 // loop_footer
      %s21 = sadd.s32 1, %s17
    $region7: #{tpu_custom_call.1} parent=1 // loop_footer_branch
      %16 = sbr.rel target = $region3
    $region8: #{tpu_custom_call.1} parent=1 // loop_exit
      _
    %406 = vsyncpa [#allocation3], 1
    %s407 = scalar_lea.sflag [#allocation3], 1
    %408 = vsyncpa %s407, 1
    %409 = vsyncpa [#allocation6], 1
    %s410 = scalar_lea.sflag [#allocation6], 1
    %411 = vsyncpa %s410, 1
    %412 = vsyncpa [#allocation4], 1
    %s413 = scalar_lea.sflag [#allocation4], 1
    %414 = vsyncpa %s413, 1

</llo_original>
